<compile_context>
chip_gen: v7x
topology: tpu7x:2x2x1
jax: 0.10.0
libtpu: 0.0.40
codegen_flags: <defaults>
</compile_context>

<pallas_src>
import functools

import jax
import jax.numpy as jnp
from jax.experimental import pallas as pl
from jax.experimental.pallas import tpu as pltpu

_LANE = 128      # lane width (last dim)
_SUBLANE = 8     # f32 sublane width (second-to-last dim)


def _round_up(n, m):
    return ((n + m - 1) // m) * m


def _mlp_kernel(x_ref, w0_ref, b0_ref, w1_ref, b1_ref, w2_ref, b2_ref, o_ref):
    # layer 0: Linear(n_in, 99 -> padded 128) + ReLU
    h0 = jnp.dot(x_ref[...], w0_ref[...], preferred_element_type=jnp.float32)
    h0 = jnp.maximum(h0 + b0_ref[...], 0.0)
    # layer 1: Linear(128, 16 -> padded 128) + ReLU
    h1 = jnp.dot(h0, w1_ref[...], preferred_element_type=jnp.float32)
    h1 = jnp.maximum(h1 + b1_ref[...], 0.0)
    # layer 2: Linear(128, 64)   (no activation on the final layer)
    h2 = jnp.dot(h1, w2_ref[...], preferred_element_type=jnp.float32)
    o_ref[...] = (h2 + b2_ref[...]).astype(o_ref.dtype)


def _pad2(a, rows, cols):
    pr, pc = rows - a.shape[0], cols - a.shape[1]
    if pr == 0 and pc == 0:
        return a
    return jnp.pad(a, ((0, pr), (0, pc)))


@functools.partial(jax.jit, static_argnames=("tile_b",))
def fc_block_forward(x, params, tile_b=2048):
    """Run the x4_def_fc_block forward pass as one batch-tiled Pallas kernel.

    x:      (batch, n_in) float32
    params: tuple (w0, b0, w1, b1, w2, b2) with wj: (in_j, out_j), bj: (1, out_j)
    tile_b: batch tile size (multiple of 8); large values enable pipelining.
    """
    w0, b0, w1, b1, w2, b2 = params
    batch, n_in = x.shape
    h0_dim = w0.shape[1]          # 99
    h1_dim = w1.shape[1]          # 16
    out_dim = w2.shape[1]         # 64

    # --- zero-pad hidden dims to lane multiples (exactness preserved) -------
    h0_p = _round_up(h0_dim, _LANE)      # 99  -> 128
    h1_p = _round_up(h1_dim, _LANE)      # 16  -> 128
    w0p = _pad2(w0, n_in, h0_p)
    b0p = _pad2(b0, 1, h0_p)
    w1p = _pad2(w1, h0_p, h1_p)
    b1p = _pad2(b1, 1, h1_p)
    w2p = _pad2(w2, h1_p, out_dim)
    b2p = b2

    # --- batch tiling --------------------------------------------------------
    tile_b = _round_up(min(int(tile_b), _round_up(batch, _SUBLANE)), _SUBLANE)
    batch_p = _round_up(batch, tile_b)
    xp = x if batch_p == batch else jnp.pad(x, ((0, batch_p - batch), (0, 0)))
    grid = (batch_p // tile_b,)

    # Weights/biases: full-array blocks, constant index_map -> VMEM-resident.
    full = lambda a: pl.BlockSpec(a.shape, lambda i: (0,) * a.ndim)

    flops = 2 * batch_p * (n_in * h0_p + h0_p * h1_p + h1_p * out_dim)
    bytes_accessed = (batch_p * (n_in + out_dim) * 4
                      + 4 * (w0p.size + b0p.size + w1p.size + b1p.size
                             + w2p.size + b2p.size))

    out_p = pl.pallas_call(
        _mlp_kernel,
        out_shape=jax.ShapeDtypeStruct((batch_p, out_dim), jnp.float32),
        grid=grid,
        in_specs=[pl.BlockSpec((tile_b, n_in), lambda i: (i, 0)),
                  full(w0p), full(b0p), full(w1p), full(b1p),
                  full(w2p), full(b2p)],
        out_specs=pl.BlockSpec((tile_b, out_dim), lambda i: (i, 0)),
        compiler_params=pltpu.CompilerParams(
            dimension_semantics=("parallel",),
            vmem_limit_bytes=32 * 1024 * 1024),
        cost_estimate=pl.CostEstimate(
            flops=flops, transcendentals=0, bytes_accessed=bytes_accessed),
    )(xp, w0p, b0p, w1p, b1p, w2p, b2p)

    return out_p[:batch] if batch_p != batch else out_p


def init_params(key, n_in, layer_widths):
    """Deterministic parameter init mirroring nn.Linear's default
    U(-1/sqrt(fan_in), 1/sqrt(fan_in)) scheme, stored as (in, out)."""
    params = []
    dims = [n_in] + list(layer_widths)
    for j in range(len(layer_widths)):
        fan_in, fan_out = dims[j], dims[j + 1]
        key, kw, kb = jax.random.split(key, 3)
        bound = 1.0 / jnp.sqrt(float(fan_in))
        w = jax.random.uniform(kw, (fan_in, fan_out), jnp.float32,
                               minval=-bound, maxval=bound)
        b = jax.random.uniform(kb, (1, fan_out), jnp.float32,
                               minval=-bound, maxval=bound)
        params += [w, b]
    return tuple(params)


def reference_forward(x, params):
    """Pure-JAX reference of the same forward pass (for a sanity check)."""
    w0, b0, w1, b1, w2, b2 = params
    h = jnp.maximum(x @ w0 + b0, 0.0)
    h = jnp.maximum(h @ w1 + b1, 0.0)
    return h @ w2 + b2


if __name__ == "__main__":
    n_in = 32
    layer_widths = [99, 16, 64]

    key = jax.random.PRNGKey(0)
    key, kx1, kx2 = jax.random.split(key, 3)
    params = init_params(key, n_in, layer_widths)

    # Small batch (single grid step).
    x_small = jax.random.normal(kx1, (8, n_in), jnp.float32)
    out_small = jax.block_until_ready(fc_block_forward(x_small, params))
    ref_small = reference_forward(x_small, params)
    assert out_small.shape == (8, layer_widths[-1])
    assert jnp.allclose(out_small, ref_small, atol=1e-5, rtol=1e-5)

    # Non-multiple batch with a small tile to exercise the multi-step,
    # pipelined grid path (batch padded to a tile multiple, then sliced back).
    x_big = jax.random.normal(kx2, (300, n_in), jnp.float32)
    out_big = jax.block_until_ready(fc_block_forward(x_big, params, tile_b=128))
    ref_big = reference_forward(x_big, params)
    assert out_big.shape == (300, layer_widths[-1])
    assert jnp.allclose(out_big, ref_big, atol=1e-5, rtol=1e-5)

    print("KERNEL_OK")
</pallas_src>

<mosaic_0001>
module attributes {stable_mosaic.version = 11 : i64} {
  func.func @_mlp_kernel(%arg0: i32, %arg1: memref<8x32xf32, #tpu.memory_space<vmem>>, %arg2: memref<32x128xf32, #tpu.memory_space<vmem>>, %arg3: memref<1x128xf32, #tpu.memory_space<vmem>>, %arg4: memref<128x128xf32, #tpu.memory_space<vmem>>, %arg5: memref<1x128xf32, #tpu.memory_space<vmem>>, %arg6: memref<128x64xf32, #tpu.memory_space<vmem>>, %arg7: memref<1x64xf32, #tpu.memory_space<vmem>>, %arg8: memref<8x64xf32, #tpu.memory_space<vmem>>) attributes {dimension_semantics = [#tpu.dimension_semantics<parallel>], iteration_bounds = array<i64: 1>, scalar_prefetch = 0 : i64, scratch_operands = 0 : i64, tpu.core_type = #tpu.core_type<tc>, window_params = [{transform_indices = @transform_0, window_bounds = array<i64: 8, 32>}, {pipeline_mode = #tpu.pipeline_mode<synchronous>, transform_indices = @transform_1, window_bounds = array<i64: 32, 128>}, {pipeline_mode = #tpu.pipeline_mode<synchronous>, transform_indices = @transform_2, window_bounds = array<i64: 1, 128>}, {pipeline_mode = #tpu.pipeline_mode<synchronous>, transform_indices = @transform_3, window_bounds = array<i64: 128, 128>}, {pipeline_mode = #tpu.pipeline_mode<synchronous>, transform_indices = @transform_4, window_bounds = array<i64: 1, 128>}, {pipeline_mode = #tpu.pipeline_mode<synchronous>, transform_indices = @transform_5, window_bounds = array<i64: 128, 64>}, {pipeline_mode = #tpu.pipeline_mode<synchronous>, transform_indices = @transform_6, window_bounds = array<i64: 1, 64>}, {transform_indices = @transform_7, window_bounds = array<i64: 8, 64>}]} {
    %c0 = arith.constant 0 : index
    %c0_0 = arith.constant 0 : index
    %0 = vector.load %arg1[%c0, %c0_0] : memref<8x32xf32, #tpu.memory_space<vmem>>, vector<8x32xf32>
    %c0_1 = arith.constant 0 : index
    %c0_2 = arith.constant 0 : index
    %1 = vector.load %arg2[%c0_1, %c0_2] : memref<32x128xf32, #tpu.memory_space<vmem>>, vector<32x128xf32>
    %cst = arith.constant dense<0.000000e+00> : vector<8x128xf32>
    %2 = tpu.matmul %0, %1, %cst {dimension_numbers = #tpu.dot_dimension_numbers<[1], [0], [0], [1], [0, 0, 1, 1], [], []>} : vector<8x32xf32>, vector<32x128xf32>, vector<8x128xf32> -> vector<8x128xf32>
    %c0_3 = arith.constant 0 : index
    %c0_4 = arith.constant 0 : index
    %3 = vector.load %arg3[%c0_3, %c0_4] : memref<1x128xf32, #tpu.memory_space<vmem>>, vector<1x128xf32>
    %4 = vector.broadcast %3 : vector<1x128xf32> to vector<8x128xf32>
    %5 = arith.addf %2, %4 : vector<8x128xf32>
    %cst_5 = arith.constant 0.000000e+00 : f32
    %6 = vector.broadcast %cst_5 : f32 to vector<8x128xf32>
    %7 = arith.maximumf %5, %6 : vector<8x128xf32>
    %c0_6 = arith.constant 0 : index
    %c0_7 = arith.constant 0 : index
    %8 = vector.load %arg4[%c0_6, %c0_7] : memref<128x128xf32, #tpu.memory_space<vmem>>, vector<128x128xf32>
    %cst_8 = arith.constant dense<0.000000e+00> : vector<8x128xf32>
    %9 = tpu.matmul %7, %8, %cst_8 {dimension_numbers = #tpu.dot_dimension_numbers<[1], [0], [0], [1], [0, 0, 1, 1], [], []>} : vector<8x128xf32>, vector<128x128xf32>, vector<8x128xf32> -> vector<8x128xf32>
    %c0_9 = arith.constant 0 : index
    %c0_10 = arith.constant 0 : index
    %10 = vector.load %arg5[%c0_9, %c0_10] : memref<1x128xf32, #tpu.memory_space<vmem>>, vector<1x128xf32>
    %11 = vector.broadcast %10 : vector<1x128xf32> to vector<8x128xf32>
    %12 = arith.addf %9, %11 : vector<8x128xf32>
    %cst_11 = arith.constant 0.000000e+00 : f32
    %13 = vector.broadcast %cst_11 : f32 to vector<8x128xf32>
    %14 = arith.maximumf %12, %13 : vector<8x128xf32>
    %c0_12 = arith.constant 0 : index
    %c0_13 = arith.constant 0 : index
    %15 = vector.load %arg6[%c0_12, %c0_13] : memref<128x64xf32, #tpu.memory_space<vmem>>, vector<128x64xf32>
    %cst_14 = arith.constant dense<0.000000e+00> : vector<8x64xf32>
    %16 = tpu.matmul %14, %15, %cst_14 {dimension_numbers = #tpu.dot_dimension_numbers<[1], [0], [0], [1], [0, 0, 1, 1], [], []>} : vector<8x128xf32>, vector<128x64xf32>, vector<8x64xf32> -> vector<8x64xf32>
    %c0_15 = arith.constant 0 : index
    %c0_16 = arith.constant 0 : index
    %17 = vector.load %arg7[%c0_15, %c0_16] : memref<1x64xf32, #tpu.memory_space<vmem>>, vector<1x64xf32>
    %18 = vector.broadcast %17 : vector<1x64xf32> to vector<8x64xf32>
    %19 = arith.addf %16, %18 : vector<8x64xf32>
    %c0_17 = arith.constant 0 : index
    %c0_18 = arith.constant 0 : index
    %20 = vector.load %arg8[%c0_17, %c0_18] : memref<8x64xf32, #tpu.memory_space<vmem>>, vector<8x64xf32>
    tpu.vector_store %arg8[%c0_17, %c0_18], %19 {strides = array<i32>} : memref<8x64xf32, #tpu.memory_space<vmem>>, vector<8x64xf32>,
    return
  }
  func.func @transform_0(%arg0: i32) -> (i32, i32) {
    %c0_i32 = arith.constant 0 : i32
    %c0_i32_0 = arith.constant 0 : i32
    return %arg0, %c0_i32 : i32, i32
  }
  func.func @transform_1(%arg0: i32) -> (i32, i32) {
    %c0_i32 = arith.constant 0 : i32
    %c0_i32_0 = arith.constant 0 : i32
    %c0_i32_1 = arith.constant 0 : i32
    return %c0_i32, %c0_i32_0 : i32, i32
  }
  func.func @transform_2(%arg0: i32) -> (i32, i32) {
    %c0_i32 = arith.constant 0 : i32
    %c0_i32_0 = arith.constant 0 : i32
    %c0_i32_1 = arith.constant 0 : i32
    return %c0_i32, %c0_i32_0 : i32, i32
  }
  func.func @transform_3(%arg0: i32) -> (i32, i32) {
    %c0_i32 = arith.constant 0 : i32
    %c0_i32_0 = arith.constant 0 : i32
    %c0_i32_1 = arith.constant 0 : i32
    return %c0_i32, %c0_i32_0 : i32, i32
  }
  func.func @transform_4(%arg0: i32) -> (i32, i32) {
    %c0_i32 = arith.constant 0 : i32
    %c0_i32_0 = arith.constant 0 : i32
    %c0_i32_1 = arith.constant 0 : i32
    return %c0_i32, %c0_i32_0 : i32, i32
  }
  func.func @transform_5(%arg0: i32) -> (i32, i32) {
    %c0_i32 = arith.constant 0 : i32
    %c0_i32_0 = arith.constant 0 : i32
    %c0_i32_1 = arith.constant 0 : i32
    return %c0_i32, %c0_i32_0 : i32, i32
  }
  func.func @transform_6(%arg0: i32) -> (i32, i32) {
    %c0_i32 = arith.constant 0 : i32
    %c0_i32_0 = arith.constant 0 : i32
    %c0_i32_1 = arith.constant 0 : i32
    return %c0_i32, %c0_i32_0 : i32, i32
  }
  func.func @transform_7(%arg0: i32) -> (i32, i32) {
    %c0_i32 = arith.constant 0 : i32
    %c0_i32_0 = arith.constant 0 : i32
    return %arg0, %c0_i32 : i32, i32
  }
}

</mosaic_0001>

<llo_original>
// kernel: fc_block_forward.1
$region0: #{fc_block_forward.1}
  #allocation0 [shape = 'u32[]', space=smem, size = 0x4, offset = 0x4, fixed_abs, tag = 'smem constant byte address 0x4 - core index']
  #allocation1 [shape = 'u32[144,128]{1,0:T(1,128)}', space=vmem, size = 0x12000, scoped, tag = 'internal scratch']
  %s0 = inlined_call_operand.vmem [shape: f32[8,32], index: 0, kind: input, shape index: {}]
  %s1 = inlined_call_operand.vmem [shape: f32[32,128], index: 1, kind: input, shape index: {}]
  %s2 = inlined_call_operand.vmem [shape: f32[1,128], index: 2, kind: input, shape index: {}]
  %s3 = inlined_call_operand.vmem [shape: f32[128,128], index: 3, kind: input, shape index: {}]
  %s4 = inlined_call_operand.vmem [shape: f32[1,128], index: 4, kind: input, shape index: {}]
  %s5 = inlined_call_operand.vmem [shape: f32[128,64], index: 5, kind: input, shape index: {}]
  %s6 = inlined_call_operand.vmem [shape: f32[1,64], index: 6, kind: input, shape index: {}]
  %s7 = inlined_call_operand.hbm [shape: f32[8,64], index: 7, kind: output, shape index: {}]
  %s8 = sld [smem:[#allocation0]]
  $region38: #{fc_block_forward.1} parent=0
    _
  %s10 = ssub.s32 1, %s8
  %s11 = scalar_select 0, %s10, %s8
  $region1: #{fc_block_forward.1} parent=0
    #allocation2 [shape = 'u8[4096]{0}', space=vmem, size = 0x1000, scoped, tag = 'output window, operand 0, single buffered']
    #allocation3 [shape = 's32[1]{0}', space=sflag, size = 0x4, scoped, tag = 'scoped memory for fc_block_forward.1']
    %12 = vsyncpa [#allocation3], 0
    // Predicated region
    $region2: #{fc_block_forward.1} parent=1 // pred_check
      _
    $region3: #{fc_block_forward.1} parent=1 // pred_check_branch
      %14 = sbr.rel (0) target = $region5
    $region4: #{fc_block_forward.1} parent=1 // pred_region
      _
    $region5: #{fc_block_forward.1} parent=1 // pred_fallthru
      _
    // Predicated region
    $region6: #{fc_block_forward.1} parent=1 // pred_check
      _
    $region7: #{fc_block_forward.1} parent=1 // pred_check_branch
      %16 = sbr.rel (0) target = $region9
    $region8: #{fc_block_forward.1} parent=1 // pred_region
      _
    $region9: #{fc_block_forward.1} parent=1 // pred_fallthru
      _
    // Predicated region
    $region10: #{fc_block_forward.1} parent=1 // pred_check
      _
    $region11: #{fc_block_forward.1} parent=1 // pred_check_branch
      %18 = sbr.rel (0) target = $region13
    $region12: #{fc_block_forward.1} parent=1 // pred_region
      _
    $region13: #{fc_block_forward.1} parent=1 // pred_fallthru
      _
    // Predicated region
    $region14: #{fc_block_forward.1} parent=1 // pred_check
      _
    $region15: #{fc_block_forward.1} parent=1 // pred_check_branch
      %20 = sbr.rel (0) target = $region17
    $region16: #{fc_block_forward.1} parent=1 // pred_region
      _
    $region17: #{fc_block_forward.1} parent=1 // pred_fallthru
      _
    // Predicated region
    $region18: #{fc_block_forward.1} parent=1 // pred_check
      _
    $region19: #{fc_block_forward.1} parent=1 // pred_check_branch
      %22 = sbr.rel (0) target = $region21
    $region20: #{fc_block_forward.1} parent=1 // pred_region
      _
    $region21: #{fc_block_forward.1} parent=1 // pred_fallthru
      _
    // Predicated region
    $region22: #{fc_block_forward.1} parent=1 // pred_check
      _
    $region23: #{fc_block_forward.1} parent=1 // pred_check_branch
      %24 = sbr.rel (0) target = $region25
    $region24: #{fc_block_forward.1} parent=1 // pred_region
      _
    $region25: #{fc_block_forward.1} parent=1 // pred_fallthru
      _
    // Predicated region
    $region26: #{fc_block_forward.1} parent=1 // pred_check
      _
    $region27: #{fc_block_forward.1} parent=1 // pred_check_branch
      %26 = sbr.rel (0) target = $region29
    $region28: #{fc_block_forward.1} parent=1 // pred_region
      _
    $region29: #{fc_block_forward.1} parent=1 // pred_fallthru
      _
    %v27 = vld [vmem:[%s0] sm:$0xff]
    %v28 = vld [vmem:[%s1] sm:$0xff]
    %v29 = vld [vmem:[%s1 + $0x8] sm:$0xff]
    %v30 = vld [vmem:[%s1 + $0x10] sm:$0xff]
    %v31 = vld [vmem:[%s1 + $0x18] sm:$0xff]
    %v32 = vld [vmem:[%s2] sm:$0x1]
    %v34 = vlaneseq
    %v35 = vshrl.u32 %v34, 7
    %v36 = vsub.s32 0, %v35
    %v37 = vrot.slane %v32, %v36
    %vm39 = vcmask 261120
    %v41 = vsel %vm39, %v27, 0
    %43 = vmatprep.subr.mxu0 0.0
    %44 = vmatpush1.msra.mxu0 %v28
    %45 = vmatprep.subr.mxu0 0.0
    %46 = vmatpush1.msra.mxu0 %v29
    %47 = vmatprep.subr.mxu0 0.0
    %48 = vmatpush1.msra.mxu0 %v30
    %49 = vmatprep.subr.mxu0 0.0
    %50 = vmatpush1.msra.mxu0 %v31
    %51 = vmatprep.subr.mxu0 0.0
    %52 = vmatpush1.msra.mxu0 0.0
    %53 = vmatprep.subr.mxu0 0.0
    %54 = vmatpush1.msra.mxu0 0.0
    %55 = vmatprep.subr.mxu0 0.0
    %56 = vmatpush1.msra.mxu0 0.0
    %57 = vmatprep.subr.mxu0 0.0
    %58 = vmatpush1.msra.mxu0 0.0
    %59 = vmatprep.subr.mxu0 0.0
    %60 = vmatpush1.msra.mxu0 0.0
    %61 = vmatprep.subr.mxu0 0.0
    %62 = vmatpush1.msra.mxu0 0.0
    %63 = vmatprep.subr.mxu0 0.0
    %64 = vmatpush1.msra.mxu0 0.0
    %65 = vmatprep.subr.mxu0 0.0
    %66 = vmatpush1.msra.mxu0 0.0
    %67 = vmatprep.subr.mxu0 0.0
    %68 = vmatpush1.msra.mxu0 0.0
    %69 = vmatprep.subr.mxu0 0.0
    %70 = vmatpush1.msra.mxu0 0.0
    %71 = vmatprep.subr.mxu0 0.0
    %72 = vmatpush1.msra.mxu0 0.0
    %73 = vmatprep.subr.mxu0 0.0
    %74 = vmatpush1.msra.mxu0 0.0
    %75 = vmatprep.subr.mxu0 0.0
    %76 = vmatpush1.msra.mxu0 0.0
    %77 = vmatprep.subr.mxu0 0.0
    %78 = vmatpush1.msra.mxu0 0.0
    %79 = vmatprep.subr.mxu0 0.0
    %80 = vmatpush1.msra.mxu0 0.0
    %81 = vmatprep.subr.mxu0 0.0
    %82 = vmatpush1.msra.mxu0 0.0
    %83 = vmatprep.subr.mxu0 0.0
    %84 = vmatpush1.msra.mxu0 0.0
    %85 = vmatprep.subr.mxu0 0.0
    %86 = vmatpush1.msra.mxu0 0.0
    %87 = vmatprep.subr.mxu0 0.0
    %88 = vmatpush1.msra.mxu0 0.0
    %89 = vmatprep.subr.mxu0 0.0
    %90 = vmatpush1.msra.mxu0 0.0
    %91 = vmatprep.subr.mxu0 0.0
    %92 = vmatpush1.msra.mxu0 0.0
    %93 = vmatprep.subr.mxu0 0.0
    %94 = vmatpush1.msra.mxu0 0.0
    %95 = vmatprep.subr.mxu0 0.0
    %96 = vmatpush1.msra.mxu0 0.0
    %97 = vmatprep.subr.mxu0 0.0
    %98 = vmatpush1.msra.mxu0 0.0
    %99 = vmatprep.subr.mxu0 0.0
    %100 = vmatpush1.msra.mxu0 0.0
    %101 = vmatprep.subr.mxu0 0.0
    %102 = vmatpush1.msra.mxu0 0.0
    %103 = vmatprep.subr.mxu0 0.0
    %104 = vmatpush1.msra.mxu0 0.0
    %105 = vmatprep.subr.mxu0 0.0
    %106 = vmatpush1.msra.mxu0 0.0
    %107 = vmatprep.mubr.f32.mxu0 0.0
    %108 = vmatmul.mubr.f32.gmra.mrb[0].mxu0 %v41
    %v109 = vpop.f32.mrb[0].mxu0
    %v110 = vadd.f32 %v37, %v109
    %v111 = vpop.f32.mrb[0].mxu0
    %112 = vdwg.mxu0
    %v113 = vmax.f32 %v110, 0.0
    %v114 = vld [vmem:[%s3] sm:$0xff]
    %v115 = vld [vmem:[%s3 + $0x8] sm:$0xff]
    %v116 = vld [vmem:[%s3 + $0x10] sm:$0xff]
    %v117 = vld [vmem:[%s3 + $0x18] sm:$0xff]
    %v118 = vld [vmem:[%s3 + $0x20] sm:$0xff]
    %v119 = vld [vmem:[%s3 + $0x28] sm:$0xff]
    %v120 = vld [vmem:[%s3 + $0x30] sm:$0xff]
    %v121 = vld [vmem:[%s3 + $0x38] sm:$0xff]
    %v122 = vld [vmem:[%s3 + $0x40] sm:$0xff]
    %v123 = vld [vmem:[%s3 + $0x48] sm:$0xff]
    %v124 = vld [vmem:[%s3 + $0x50] sm:$0xff]
    %v125 = vld [vmem:[%s3 + $0x58] sm:$0xff]
    %v126 = vld [vmem:[%s3 + $0x60] sm:$0xff]
    %v127 = vld [vmem:[%s3 + $0x68] sm:$0xff]
    %v128 = vld [vmem:[%s3 + $0x70] sm:$0xff]
    %v129 = vld [vmem:[%s3 + $0x78] sm:$0xff]
    %v130 = vld [vmem:[%s4] sm:$0x1]
    %v132 = vlaneseq
    %v133 = vshrl.u32 %v132, 7
    %v134 = vsub.s32 0, %v133
    %v135 = vrot.slane %v130, %v134
    %137 = vmatprep.subr.mxu0 0.0
    %138 = vmatpush1.msra.mxu0 %v114
    %139 = vmatprep.subr.mxu0 0.0
    %140 = vmatpush1.msra.mxu0 %v115
    %141 = vmatprep.subr.mxu0 0.0
    %142 = vmatpush1.msra.mxu0 %v116
    %143 = vmatprep.subr.mxu0 0.0
    %144 = vmatpush1.msra.mxu0 %v117
    %145 = vmatprep.subr.mxu0 0.0
    %146 = vmatpush1.msra.mxu0 %v118
    %147 = vmatprep.subr.mxu0 0.0
    %148 = vmatpush1.msra.mxu0 %v119
    %149 = vmatprep.subr.mxu0 0.0
    %150 = vmatpush1.msra.mxu0 %v120
    %151 = vmatprep.subr.mxu0 0.0
    %152 = vmatpush1.msra.mxu0 %v121
    %153 = vmatprep.subr.mxu0 0.0
    %154 = vmatpush1.msra.mxu0 %v122
    %155 = vmatprep.subr.mxu0 0.0
    %156 = vmatpush1.msra.mxu0 %v123
    %157 = vmatprep.subr.mxu0 0.0
    %158 = vmatpush1.msra.mxu0 %v124
    %159 = vmatprep.subr.mxu0 0.0
    %160 = vmatpush1.msra.mxu0 %v125
    %161 = vmatprep.subr.mxu0 0.0
    %162 = vmatpush1.msra.mxu0 %v126
    %163 = vmatprep.subr.mxu0 0.0
    %164 = vmatpush1.msra.mxu0 %v127
    %165 = vmatprep.subr.mxu0 0.0
    %166 = vmatpush1.msra.mxu0 %v128
    %167 = vmatprep.subr.mxu0 0.0
    %168 = vmatpush1.msra.mxu0 %v129
    %169 = vmatprep.subr.mxu0 0.0
    %170 = vmatpush1.msra.mxu0 0.0
    %171 = vmatprep.subr.mxu0 0.0
    %172 = vmatpush1.msra.mxu0 0.0
    %173 = vmatprep.subr.mxu0 0.0
    %174 = vmatpush1.msra.mxu0 0.0
    %175 = vmatprep.subr.mxu0 0.0
    %176 = vmatpush1.msra.mxu0 0.0
    %177 = vmatprep.subr.mxu0 0.0
    %178 = vmatpush1.msra.mxu0 0.0
    %179 = vmatprep.subr.mxu0 0.0
    %180 = vmatpush1.msra.mxu0 0.0
    %181 = vmatprep.subr.mxu0 0.0
    %182 = vmatpush1.msra.mxu0 0.0
    %183 = vmatprep.subr.mxu0 0.0
    %184 = vmatpush1.msra.mxu0 0.0
    %185 = vmatprep.subr.mxu0 0.0
    %186 = vmatpush1.msra.mxu0 0.0
    %187 = vmatprep.subr.mxu0 0.0
    %188 = vmatpush1.msra.mxu0 0.0
    %189 = vmatprep.subr.mxu0 0.0
    %190 = vmatpush1.msra.mxu0 0.0
    %191 = vmatprep.subr.mxu0 0.0
    %192 = vmatpush1.msra.mxu0 0.0
    %193 = vmatprep.subr.mxu0 0.0
    %194 = vmatpush1.msra.mxu0 0.0
    %195 = vmatprep.subr.mxu0 0.0
    %196 = vmatpush1.msra.mxu0 0.0
    %197 = vmatprep.subr.mxu0 0.0
    %198 = vmatpush1.msra.mxu0 0.0
    %199 = vmatprep.subr.mxu0 0.0
    %200 = vmatpush1.msra.mxu0 0.0
    %201 = vmatprep.mubr.f32.mxu0 0.0
    %202 = vmatmul.mubr.f32.gmra.mrb[0].mxu0 %v113
    %v203 = vpop.f32.mrb[0].mxu0
    %v204 = vadd.f32 %v135, %v203
    %v205 = vpop.f32.mrb[0].mxu0
    %206 = vdwg.mxu0
    %v207 = vmax.f32 %v204, 0.0
    %v208 = vld [vmem:[%s5] sm:$0xff]
    %v209 = vld [vmem:[%s5 + $0x8] sm:$0xff]
    %v210 = vld [vmem:[%s5 + $0x10] sm:$0xff]
    %v211 = vld [vmem:[%s5 + $0x18] sm:$0xff]
    %v212 = vld [vmem:[%s5 + $0x20] sm:$0xff]
    %v213 = vld [vmem:[%s5 + $0x28] sm:$0xff]
    %v214 = vld [vmem:[%s5 + $0x30] sm:$0xff]
    %v215 = vld [vmem:[%s5 + $0x38] sm:$0xff]
    %v216 = vld [vmem:[%s5 + $0x40] sm:$0xff]
    %v217 = vld [vmem:[%s5 + $0x48] sm:$0xff]
    %v218 = vld [vmem:[%s5 + $0x50] sm:$0xff]
    %v219 = vld [vmem:[%s5 + $0x58] sm:$0xff]
    %v220 = vld [vmem:[%s5 + $0x60] sm:$0xff]
    %v221 = vld [vmem:[%s5 + $0x68] sm:$0xff]
    %v222 = vld [vmem:[%s5 + $0x70] sm:$0xff]
    %v223 = vld [vmem:[%s5 + $0x78] sm:$0xff]
    %v224 = vld [vmem:[%s6] sm:$0x1]
    %v226 = vlaneseq
    %v227 = vshrl.u32 %v226, 7
    %v228 = vsub.s32 0, %v227
    %v229 = vrot.slane %v224, %v228
    %231 = vmatprep.subr.mxu0 0.0
    %232 = vmatpush1.msra.mxu0 %v208
    %233 = vmatprep.subr.mxu0 0.0
    %234 = vmatpush1.msra.mxu0 %v209
    %235 = vmatprep.subr.mxu0 0.0
    %236 = vmatpush1.msra.mxu0 %v210
    %237 = vmatprep.subr.mxu0 0.0
    %238 = vmatpush1.msra.mxu0 %v211
    %239 = vmatprep.subr.mxu0 0.0
    %240 = vmatpush1.msra.mxu0 %v212
    %241 = vmatprep.subr.mxu0 0.0
    %242 = vmatpush1.msra.mxu0 %v213
    %243 = vmatprep.subr.mxu0 0.0
    %244 = vmatpush1.msra.mxu0 %v214
    %245 = vmatprep.subr.mxu0 0.0
    %246 = vmatpush1.msra.mxu0 %v215
    %247 = vmatprep.subr.mxu0 0.0
    %248 = vmatpush1.msra.mxu0 %v216
    %249 = vmatprep.subr.mxu0 0.0
    %250 = vmatpush1.msra.mxu0 %v217
    %251 = vmatprep.subr.mxu0 0.0
    %252 = vmatpush1.msra.mxu0 %v218
    %253 = vmatprep.subr.mxu0 0.0
    %254 = vmatpush1.msra.mxu0 %v219
    %255 = vmatprep.subr.mxu0 0.0
    %256 = vmatpush1.msra.mxu0 %v220
    %257 = vmatprep.subr.mxu0 0.0
    %258 = vmatpush1.msra.mxu0 %v221
    %259 = vmatprep.subr.mxu0 0.0
    %260 = vmatpush1.msra.mxu0 %v222
    %261 = vmatprep.subr.mxu0 0.0
    %262 = vmatpush1.msra.mxu0 %v223
    %263 = vmatprep.subr.mxu0 0.0
    %264 = vmatpush1.msra.mxu0 0.0
    %265 = vmatprep.subr.mxu0 0.0
    %266 = vmatpush1.msra.mxu0 0.0
    %267 = vmatprep.subr.mxu0 0.0
    %268 = vmatpush1.msra.mxu0 0.0
    %269 = vmatprep.subr.mxu0 0.0
    %270 = vmatpush1.msra.mxu0 0.0
    %271 = vmatprep.subr.mxu0 0.0
    %272 = vmatpush1.msra.mxu0 0.0
    %273 = vmatprep.subr.mxu0 0.0
    %274 = vmatpush1.msra.mxu0 0.0
    %275 = vmatprep.subr.mxu0 0.0
    %276 = vmatpush1.msra.mxu0 0.0
    %277 = vmatprep.subr.mxu0 0.0
    %278 = vmatpush1.msra.mxu0 0.0
    %279 = vmatprep.subr.mxu0 0.0
    %280 = vmatpush1.msra.mxu0 0.0
    %281 = vmatprep.subr.mxu0 0.0
    %282 = vmatpush1.msra.mxu0 0.0
    %283 = vmatprep.subr.mxu0 0.0
    %284 = vmatpush1.msra.mxu0 0.0
    %285 = vmatprep.subr.mxu0 0.0
    %286 = vmatpush1.msra.mxu0 0.0
    %287 = vmatprep.subr.mxu0 0.0
    %288 = vmatpush1.msra.mxu0 0.0
    %289 = vmatprep.subr.mxu0 0.0
    %290 = vmatpush1.msra.mxu0 0.0
    %291 = vmatprep.subr.mxu0 0.0
    %292 = vmatpush1.msra.mxu0 0.0
    %293 = vmatprep.subr.mxu0 0.0
    %294 = vmatpush1.msra.mxu0 0.0
    %295 = vmatprep.mubr.f32.mxu0 0.0
    %296 = vmatmul.mubr.f32.gmra.mrb[0].mxu0 %v207
    %v297 = vpop.f32.mrb[0].mxu0
    %v298 = vadd.f32 %v229, %v297
    %v299 = vpop.f32.mrb[0].mxu0
    %300 = vdwg.mxu0
    %vm301 = vcmask 523264
    %302 = vst.msk [vmem:[#allocation2] sm:$0xff] %vm301, %v298
    // Predicated region
    $region30: #{fc_block_forward.1} parent=1 // pred_check
      _
    $region31: #{fc_block_forward.1} parent=1 // pred_check_branch
      %304 = sbr.rel (0) target = $region33
    $region32: #{fc_block_forward.1} parent=1 // pred_region
      %s306 = ssub.s32 128, 128
      %307 = vsyncadd [#allocation3], %s306
      %s309 = sshll.u32 [#allocation2], 4
      %s310 = int_to_ptr.vmem [resolvable:$true] %s309
      %312 = dma.vmem_to_hbm [thread:$0]  %s310, 128, %s7, [#allocation3]
    $region33: #{fc_block_forward.1} parent=1 // pred_fallthru
      _
    // Predicated region
    $region34: #{fc_block_forward.1} parent=1 // pred_check
      _
    $region35: #{fc_block_forward.1} parent=1 // pred_check_branch
      %314 = sbr.rel (0) target = $region37
    $region36: #{fc_block_forward.1} parent=1 // pred_region
      %315 = dma.done [#allocation3], 128
    $region37: #{fc_block_forward.1} parent=1 // pred_fallthru
      _
    %316 = vsyncpa [#allocation3], 1

</llo_original>
